<compile_context>
chip_gen: v5e
topology: v5e:2x2
jax: 0.10.0
libtpu: 0.0.40
codegen_flags: <defaults>
</compile_context>

<pallas_src>
import jax
import jax.numpy as jnp
from jax.experimental import pallas as pl
from jax.experimental.pallas import tpu as pltpu


def house_classifier_kernel(x_t_ref, a_bd_t_ref, params_ref, pool_ref, b_ro_ref, out_ref):
    """One batch tile per grid step, transposed/lane-dense layout.

    x_t_ref    : [F, Bb*N]      x_t[f, b*N+n] = x[b, n, f]
    a_bd_t_ref : [Bb*N, Bb*N]   kron(I_Bb, adj_norm.T) (row-normalized adjacency)
    params_ref : [H, 2F+2]      [:, :2F] = concat(W_rel, W_root).T,
                                [:, 2F] = lin_root bias, [:, 2F+1] = read_out weight
    pool_ref   : [Bb*N, Bb]     kron(I_Bb, ones(N,1))  — per-graph node sum
    b_ro_ref   : [1] (SMEM)     read_out bias scalar
    out_ref    : [1, Bb]        sigmoid(logits), batch on the lane axis
    """
    x_t = x_t_ref[...]                                            # [F, Bb*N]
    f_dim = x_t.shape[0]

    # ---- DenseSAGEConv aggregation: one 2-D matmul vs. block-diagonal adjacency ----
    agg_t = jnp.dot(x_t, a_bd_t_ref[...],
                    preferred_element_type=jnp.float32)           # [F, Bb*N]

    # ---- fused lin_rel + lin_root: single [H, 2F] @ [2F, Bb*N] matmul ----
    cat_t = jnp.concatenate([agg_t.astype(x_t.dtype), x_t], axis=0)   # [2F, Bb*N]
    w_cat_t = params_ref[:, 0:2 * f_dim]                          # [H, 2F]
    b_root_col = params_ref[:, 2 * f_dim:2 * f_dim + 1]           # [H, 1]
    w_ro_col = params_ref[:, 2 * f_dim + 1:2 * f_dim + 2]         # [H, 1]

    h = jnp.dot(w_cat_t, cat_t, preferred_element_type=jnp.float32)   # [H, Bb*N]
    h = jnp.maximum(h + b_root_col.astype(jnp.float32), 0.0)          # + bias, ReLU

    # ---- sum over nodes of each graph: one matmul with the 0/1 pooling matrix ----
    pooled_t = jnp.dot(h, pool_ref[...],
                       preferred_element_type=jnp.float32)        # [H, Bb]

    # ---- read_out Linear(H, 1): mul + sublane reduce, scalar bias from SMEM, sigmoid ----
    logits = (jnp.sum(pooled_t * w_ro_col.astype(jnp.float32), axis=0, keepdims=True)
              + b_ro_ref[0])                                      # [1, Bb]
    out_ref[...] = jax.nn.sigmoid(logits)                         # lane-dense store


def house_classifier_forward(x, adj, w_rel, w_root, b_root, w_ro, b_ro,
                             *, batch_tile=None, input_dtype=jnp.float32):
    B, N, F = x.shape
    H = w_rel.shape[1]
    assert adj.shape == (1, N, N)

    Bb = B if batch_tile is None else batch_tile
    assert B % Bb == 0, "batch_tile must divide B"
    # Tiled (Bb < B) lane-dense blocks need 128-lane alignment on the batch axis.
    assert Bb == B or Bb % 128 == 0, "batch_tile must equal B or be a multiple of 128"

    # ---- batch-invariant prep, hoisted out of the kernel ----
    # adj_norm = adj / clamp(adj.sum(-1, keepdim=True), min=1)   (same math as (adj@x)/deg)
    adj2 = adj[0].astype(jnp.float32)
    deg = jnp.maximum(jnp.sum(adj2, axis=-1, keepdims=True), 1.0)
    adj_norm = adj2 / deg                                               # [N, N]
    # per-tile block-diagonal transposed adjacency and per-graph pooling matrix
    a_bd_t = jnp.kron(jnp.eye(Bb, dtype=jnp.float32), adj_norm.T)       # [Bb*N, Bb*N]
    pool_mat = jnp.kron(jnp.eye(Bb, dtype=jnp.float32),
                        jnp.ones((N, 1), jnp.float32))                  # [Bb*N, Bb]
    # packed parameters: [W_rel; W_root].T | b_root | w_ro   ->  one [H, 2F+2] operand
    w_cat_t = jnp.concatenate([w_rel, w_root], axis=0).T                # [H, 2F]
    params = jnp.concatenate(
        [w_cat_t, jnp.reshape(b_root, (1, H)).T, jnp.reshape(w_ro, (H, 1))],
        axis=1).astype(jnp.float32)                                     # [H, 2F+2]

    # ---- per-call input prep: lane-dense features x_t[f, b*N+n] = x[b, n, f] ----
    x_t = jnp.transpose(x, (2, 0, 1)).reshape(F, B * N)

    # Optional bf16 cast for the HBM-bound large-Bb regime (f32 accumulation in-kernel).
    x_t = x_t.astype(input_dtype)
    a_bd_t = a_bd_t.astype(input_dtype)
    params = params.astype(input_dtype)

    b_ro_s = jnp.reshape(b_ro, (1,)).astype(jnp.float32)                # SMEM scalar

    out_row = pl.pallas_call(
        house_classifier_kernel,
        out_shape=jax.ShapeDtypeStruct((1, B), jnp.float32),
        grid=(B // Bb,),
        in_specs=[
            pl.BlockSpec((F, Bb * N), lambda i: (0, i)),          # x_t (batch tile)
            pl.BlockSpec((Bb * N, Bb * N), lambda i: (0, 0)),     # block-diag adj^T (shared)
            pl.BlockSpec((H, 2 * F + 2), lambda i: (0, 0)),       # packed params (shared)
            pl.BlockSpec((Bb * N, Bb), lambda i: (0, 0)),         # pooling matrix (shared)
            pl.BlockSpec(memory_space=pltpu.MemorySpace.SMEM),    # read_out bias (scalar)
        ],
        out_specs=pl.BlockSpec((1, Bb), lambda i: (0, i)),        # lane-dense logits
        compiler_params=pltpu.CompilerParams(
            # v7x: pick batch_tile so B // Bb >= 2 to occupy both TensorCores; budget the
            # tile (x_t double-buffer + [2F,Bb*N] + [H,Bb*N] intermediates) against 64 MiB
            # VMEM on v7x vs 128 MiB on v5e/v6e.
            dimension_semantics=("parallel",)),
    )(x_t, a_bd_t, params, pool_mat, b_ro_s)

    return jnp.reshape(out_row, (B, 1))


def reference_forward(x, adj, w_rel, w_root, b_root, w_ro, b_ro):
    # pure-JAX reference matching the PyTorch forward ('adj' branch, DenseSAGEConv normalize=False)
    B = x.shape[0]
    adj_b = jnp.broadcast_to(adj, (B,) + adj.shape[1:])
    agg = jnp.einsum('bnm,bmf->bnf', adj_b, x)
    deg = jnp.maximum(jnp.sum(adj, axis=-1, keepdims=True), 1.0)   # clamp(min=1)
    agg = agg / deg
    h = agg @ w_rel + x @ w_root + b_root
    h = jnp.maximum(h, 0.0)
    pooled = jnp.sum(h, axis=1)
    return jax.nn.sigmoid(pooled @ w_ro + b_ro)


if __name__ == "__main__":
    key = jax.random.PRNGKey(0)
    kx, ka, k1, k2, k3, k4, k5 = jax.random.split(key, 7)

    B, N, F, H = 2, 16, 8, 16   # batch, nodes, num_features, latent_dim[0]

    # node features
    x = jax.random.normal(kx, (B, N, F), dtype=jnp.float32)
    # dense adjacency (0/1), shared across the batch (as in the 'adj' branch)
    adj = (jax.random.uniform(ka, (1, N, N)) > 0.7).astype(jnp.float32)

    # deterministic parameter init (shapes from DenseSAGEConv(F, H) and Linear(H, 1))
    w_rel = jax.random.normal(k1, (F, H), dtype=jnp.float32) * 0.1   # lin_rel (no bias)
    w_root = jax.random.normal(k2, (F, H), dtype=jnp.float32) * 0.1  # lin_root
    b_root = jax.random.normal(k3, (1, H), dtype=jnp.float32) * 0.1  # lin_root bias
    w_ro = jax.random.normal(k4, (H, 1), dtype=jnp.float32) * 0.1    # read_out weight
    b_ro = jax.random.normal(k5, (1, 1), dtype=jnp.float32) * 0.1    # read_out bias

    out = house_classifier_forward(x, adj, w_rel, w_root, b_root, w_ro, b_ro)
    out = jax.block_until_ready(out)

    ref = reference_forward(x, adj, w_rel, w_root, b_root, w_ro, b_ro)
    assert out.shape == (B, 1)
    assert jnp.allclose(out, ref, atol=1e-5, rtol=1e-5), (out, ref)

    print("KERNEL_OK")
</pallas_src>

<mosaic_0001>
module attributes {stable_mosaic.version = 11 : i64} {
  func.func @house_classifier_kernel(%arg0: i32, %arg1: memref<8x32xf32, #tpu.memory_space<vmem>>, %arg2: memref<32x32xf32, #tpu.memory_space<vmem>>, %arg3: memref<16x18xf32, #tpu.memory_space<vmem>>, %arg4: memref<32x2xf32, #tpu.memory_space<vmem>>, %arg5: memref<1xf32, #tpu.memory_space<smem>>, %arg6: memref<1x2xf32, #tpu.memory_space<vmem>>) attributes {dimension_semantics = [#tpu.dimension_semantics<parallel>], iteration_bounds = array<i64: 1>, scalar_prefetch = 0 : i64, scratch_operands = 0 : i64, tpu.core_type = #tpu.core_type<tc>, window_params = [{transform_indices = @transform_0, window_bounds = array<i64: 8, 32>}, {pipeline_mode = #tpu.pipeline_mode<synchronous>, transform_indices = @transform_1, window_bounds = array<i64: 32, 32>}, {pipeline_mode = #tpu.pipeline_mode<synchronous>, transform_indices = @transform_2, window_bounds = array<i64: 16, 18>}, {pipeline_mode = #tpu.pipeline_mode<synchronous>, transform_indices = @transform_3, window_bounds = array<i64: 32, 2>}, {transform_indices = @transform_4, window_bounds = array<i64: 1>}, {transform_indices = @transform_5, window_bounds = array<i64: 1, 2>}]} {
    %c0 = arith.constant 0 : index
    %c0_0 = arith.constant 0 : index
    %0 = vector.load %arg1[%c0, %c0_0] : memref<8x32xf32, #tpu.memory_space<vmem>>, vector<8x32xf32>
    %c0_1 = arith.constant 0 : index
    %c0_2 = arith.constant 0 : index
    %1 = vector.load %arg2[%c0_1, %c0_2] : memref<32x32xf32, #tpu.memory_space<vmem>>, vector<32x32xf32>
    %cst = arith.constant dense<0.000000e+00> : vector<8x32xf32>
    %2 = tpu.matmul %0, %1, %cst {dimension_numbers = #tpu.dot_dimension_numbers<[1], [0], [0], [1], [0, 0, 1, 1], [], []>} : vector<8x32xf32>, vector<32x32xf32>, vector<8x32xf32> -> vector<8x32xf32>
    %3 = tpu.concatenate %2, %0 in 0 : vector<8x32xf32>, vector<8x32xf32> -> vector<16x32xf32>
    %c0_3 = arith.constant 0 : index
    %c0_4 = arith.constant 0 : index
    %4 = vector.load %arg3[%c0_3, %c0_4] : memref<16x18xf32, #tpu.memory_space<vmem>>, vector<16x16xf32>
    %c0_5 = arith.constant 0 : index
    %c16 = arith.constant 16 : index
    %5 = vector.load %arg3[%c0_5, %c16] : memref<16x18xf32, #tpu.memory_space<vmem>>, vector<16x1xf32>
    %c0_6 = arith.constant 0 : index
    %c17 = arith.constant 17 : index
    %6 = vector.load %arg3[%c0_6, %c17] : memref<16x18xf32, #tpu.memory_space<vmem>>, vector<16x1xf32>
    %cst_7 = arith.constant dense<0.000000e+00> : vector<16x32xf32>
    %7 = tpu.matmul %4, %3, %cst_7 {dimension_numbers = #tpu.dot_dimension_numbers<[1], [0], [0], [1], [0, 0, 1, 1], [], []>} : vector<16x16xf32>, vector<16x32xf32>, vector<16x32xf32> -> vector<16x32xf32>
    %8 = vector.broadcast %5 : vector<16x1xf32> to vector<16x32xf32>
    %9 = arith.addf %7, %8 : vector<16x32xf32>
    %cst_8 = arith.constant 0.000000e+00 : f32
    %10 = vector.broadcast %cst_8 : f32 to vector<16x32xf32>
    %11 = arith.maximumf %9, %10 : vector<16x32xf32>
    %c0_9 = arith.constant 0 : index
    %c0_10 = arith.constant 0 : index
    %12 = vector.load %arg4[%c0_9, %c0_10] : memref<32x2xf32, #tpu.memory_space<vmem>>, vector<32x2xf32>
    %cst_11 = arith.constant dense<0.000000e+00> : vector<16x2xf32>
    %13 = tpu.matmul %11, %12, %cst_11 {dimension_numbers = #tpu.dot_dimension_numbers<[1], [0], [0], [1], [0, 0, 1, 1], [], []>} : vector<16x32xf32>, vector<32x2xf32>, vector<16x2xf32> -> vector<16x2xf32>
    %14 = vector.broadcast %6 : vector<16x1xf32> to vector<16x2xf32>
    %15 = arith.mulf %13, %14 : vector<16x2xf32>
    %cst_12 = arith.constant dense<0.000000e+00> : vector<2xf32>
    %16 = vector.multi_reduction <add>, %15, %cst_12 [0] : vector<16x2xf32> to vector<2xf32>
    %17 = vector.shape_cast %16 : vector<2xf32> to vector<1x2xf32>
    %c0_13 = arith.constant 0 : index
    %18 = memref.load %arg5[%c0_13] : memref<1xf32, #tpu.memory_space<smem>>
    %19 = vector.broadcast %18 : f32 to vector<1x2xf32>
    %20 = arith.addf %17, %19 : vector<1x2xf32>
    %21 = arith.negf %20 : vector<1x2xf32>
    %22 = math.exp %21 : vector<1x2xf32>
    %cst_14 = arith.constant 1.000000e+00 : f32
    %23 = vector.broadcast %cst_14 : f32 to vector<1x2xf32>
    %24 = arith.addf %23, %22 : vector<1x2xf32>
    %25 = arith.divf %23, %24 : vector<1x2xf32>
    %c0_15 = arith.constant 0 : index
    %c0_16 = arith.constant 0 : index
    %26 = vector.load %arg6[%c0_15, %c0_16] : memref<1x2xf32, #tpu.memory_space<vmem>>, vector<1x2xf32>
    tpu.vector_store %arg6[%c0_15, %c0_16], %25 {strides = array<i32>} : memref<1x2xf32, #tpu.memory_space<vmem>>, vector<1x2xf32>,
    return
  }
  func.func @transform_0(%arg0: i32) -> (i32, i32) {
    %c0_i32 = arith.constant 0 : i32
    %c0_i32_0 = arith.constant 0 : i32
    return %c0_i32, %arg0 : i32, i32
  }
  func.func @transform_1(%arg0: i32) -> (i32, i32) {
    %c0_i32 = arith.constant 0 : i32
    %c0_i32_0 = arith.constant 0 : i32
    %c0_i32_1 = arith.constant 0 : i32
    return %c0_i32, %c0_i32_0 : i32, i32
  }
  func.func @transform_2(%arg0: i32) -> (i32, i32) {
    %c0_i32 = arith.constant 0 : i32
    %c0_i32_0 = arith.constant 0 : i32
    %c0_i32_1 = arith.constant 0 : i32
    return %c0_i32, %c0_i32_0 : i32, i32
  }
  func.func @transform_3(%arg0: i32) -> (i32, i32) {
    %c0_i32 = arith.constant 0 : i32
    %c0_i32_0 = arith.constant 0 : i32
    %c0_i32_1 = arith.constant 0 : i32
    return %c0_i32, %c0_i32_0 : i32, i32
  }
  func.func @transform_4(%arg0: i32) -> i32 {
    %c0_i32 = arith.constant 0 : i32
    %c0_i32_0 = arith.constant 0 : i32
    return %c0_i32 : i32
  }
  func.func @transform_5(%arg0: i32) -> (i32, i32) {
    %c0_i32 = arith.constant 0 : i32
    %c0_i32_0 = arith.constant 0 : i32
    return %c0_i32, %arg0 : i32, i32
  }
}

</mosaic_0001>

<llo_original>
// kernel: tpu_custom_call.1
$region0: #{tpu_custom_call.1}
  #allocation0 [shape = 'u32[]', space=smem, size = 0x4, offset = 0x4, fixed_abs, tag = 'smem constant byte address 0x4 - core index']
  #allocation1 [shape = 'u32[72,128]{1,0:T(1,128)}', space=vmem, size = 0x9000, scoped, tag = 'internal scratch']
  #allocation2 [shape = 'f32[1]{0:T(128)S(6)}', space=smem, size = 0x200, scoped, tag = 'scoped memory for tpu_custom_call.1']
  %s0 = inlined_call_operand.hbm [shape: f32[8,32], index: 0, kind: input, shape index: {}]
  %s1 = inlined_call_operand.vmem [shape: f32[32,32], index: 1, kind: input, shape index: {}]
  %s2 = inlined_call_operand.hbm [shape: f32[16,18], index: 2, kind: input, shape index: {}]
  %s3 = inlined_call_operand.vmem [shape: f32[32,2], index: 3, kind: input, shape index: {}]
  %s4 = inlined_call_operand.<no memory space> [shape: f32[1], index: 4, kind: input, shape index: {}]
  %s5 = inlined_call_operand.hbm [shape: f32[1,2], index: 5, kind: output, shape index: {}]
  %s6 = sld [smem:[#allocation0]]
  $region38: #{tpu_custom_call.1} parent=0
    _
  %s8 = ssub.s32 1, %s6
  %s9 = scalar_select 0, %s8, %s6
  %10 = sst [smem:[#allocation2]] %s4
  $region1: #{tpu_custom_call.1} parent=0
    #allocation3 [shape = 'u8[4096]{0}', space=vmem, size = 0x1000, scoped, tag = 'input window, operand 0, single buffered']
    #allocation4 [shape = 's32[1]{0}', space=sflag, size = 0x4, scoped, tag = 'scoped memory for tpu_custom_call.1']
    #allocation5 [shape = 's32[1]{0}', space=sflag, size = 0x4, scoped, tag = 'scoped memory for tpu_custom_call.1']
    #allocation6 [shape = 'u8[8192]{0}', space=vmem, size = 0x2000, scoped, tag = 'input window, operand 2, single buffered']
    #allocation7 [shape = 's32[1]{0}', space=sflag, size = 0x4, scoped, tag = 'scoped memory for tpu_custom_call.1']
    #allocation8 [shape = 'u8[512]{0}', space=vmem, size = 0x400, scoped, tag = 'output window, operand 0, single buffered']
    %11 = vsyncpa [#allocation4], 0
    %12 = vsyncpa [#allocation7], 0
    %13 = vsyncpa [#allocation5], 0
    // Predicated region
    $region2: #{tpu_custom_call.1} parent=1 // pred_check
      _
    $region3: #{tpu_custom_call.1} parent=1 // pred_check_branch
      %15 = sbr.rel (0) target = $region5
    $region4: #{tpu_custom_call.1} parent=1 // pred_region
      %17 = vsyncadd [#allocation4], 0
      %s19 = sshll.u32 %s0, 4
      %s20 = int_to_ptr.hbm [resolvable:$true] %s19
      %s21 = sshll.u32 [#allocation3], 4
      %s22 = int_to_ptr.vmem [resolvable:$true] %s21
      %24 = dma.hbm_to_vmem [thread:$0]  %s20, 128, %s22, [#allocation4]
    $region5: #{tpu_custom_call.1} parent=1 // pred_fallthru
      _
    // Predicated region
    $region6: #{tpu_custom_call.1} parent=1 // pred_check
      _
    $region7: #{tpu_custom_call.1} parent=1 // pred_check_branch
      %26 = sbr.rel (0) target = $region9
    $region8: #{tpu_custom_call.1} parent=1 // pred_region
      _
    $region9: #{tpu_custom_call.1} parent=1 // pred_fallthru
      _
    // Predicated region
    $region10: #{tpu_custom_call.1} parent=1 // pred_check
      _
    $region11: #{tpu_custom_call.1} parent=1 // pred_check_branch
      %28 = sbr.rel (0) target = $region13
    $region12: #{tpu_custom_call.1} parent=1 // pred_region
      %30 = vsyncadd [#allocation7], 0
      %s31 = sshll.u32 %s2, 4
      %s32 = int_to_ptr.hbm [resolvable:$true] %s31
      %s33 = sshll.u32 [#allocation6], 4
      %s34 = int_to_ptr.vmem [resolvable:$true] %s33
      %39 = dma.hbm_to_vmem [thread:$0]  %s32, 256, %s34, [#allocation7], 128, 128, 8
    $region13: #{tpu_custom_call.1} parent=1 // pred_fallthru
      _
    // Predicated region
    $region14: #{tpu_custom_call.1} parent=1 // pred_check
      _
    $region15: #{tpu_custom_call.1} parent=1 // pred_check_branch
      %41 = sbr.rel (0) target = $region17
    $region16: #{tpu_custom_call.1} parent=1 // pred_region
      _
    $region17: #{tpu_custom_call.1} parent=1 // pred_fallthru
      _
    // Predicated region
    $region18: #{tpu_custom_call.1} parent=1 // pred_check
      _
    $region19: #{tpu_custom_call.1} parent=1 // pred_check_branch
      %43 = sbr.rel (0) target = $region21
    $region20: #{tpu_custom_call.1} parent=1 // pred_region
      _
    $region21: #{tpu_custom_call.1} parent=1 // pred_fallthru
      _
    // Predicated region
    $region22: #{tpu_custom_call.1} parent=1 // pred_check
      _
    $region23: #{tpu_custom_call.1} parent=1 // pred_check_branch
      %45 = sbr.rel (0) target = $region25
    $region24: #{tpu_custom_call.1} parent=1 // pred_region
      %47 = dma.done [#allocation4], 128
    $region25: #{tpu_custom_call.1} parent=1 // pred_fallthru
      _
    // Predicated region
    $region26: #{tpu_custom_call.1} parent=1 // pred_check
      _
    $region27: #{tpu_custom_call.1} parent=1 // pred_check_branch
      %49 = sbr.rel (0) target = $region29
    $region28: #{tpu_custom_call.1} parent=1 // pred_region
      %51 = dma.done [#allocation7], 256
    $region29: #{tpu_custom_call.1} parent=1 // pred_fallthru
      _
    %v52 = vld [vmem:[#allocation3] sm:$0xff]
    %v53 = vld [vmem:[%s1] sm:$0xff]
    %v54 = vld [vmem:[%s1 + $0x8] sm:$0xff]
    %v55 = vld [vmem:[%s1 + $0x10] sm:$0xff]
    %v56 = vld [vmem:[%s1 + $0x18] sm:$0xff]
    %vm57 = vcmask 261120
    %v59 = vsel %vm57, %v52, 0
    %61 = vmatpush.msra.mxu0 0.0
    %62 = vmatpush.msra.mxu0 0.0
    %63 = vmatpush.msra.mxu0 0.0
    %64 = vmatpush.msra.mxu0 0.0
    %65 = vmatpush.msra.mxu0 0.0
    %66 = vmatpush.msra.mxu0 0.0
    %67 = vmatpush.msra.mxu0 0.0
    %68 = vmatpush.msra.mxu0 0.0
    %69 = vmatpush.msra.mxu0 0.0
    %70 = vmatpush.msra.mxu0 0.0
    %71 = vmatpush.msra.mxu0 0.0
    %72 = vmatpush.msra.mxu0 0.0
    %73 = vmatpush.msra.mxu0 %v56
    %74 = vmatpush.msra.mxu0 %v55
    %75 = vmatpush.msra.mxu0 %v54
    %76 = vmatpush.msra.mxu0 %v53
    %77 = vmatmul.f32.gmra.mxu0 %v59
    %v78 = vpop.f32.mrf.mxu0
    %v79 = vadd.f32 0.0, %v78
    %80 = vdwg.mxu0
    %v81 = vld [vmem:[#allocation6] sm:$0xff]
    %v82 = vld [vmem:[#allocation6 + $0x8] sm:$0xff]
    %84 = vset.pattern.permute.xlu0 16
    %85 = vperm.xlu0 %84, %v81
    %v86 = vpop.permute.xlu0 %85
    %89 = vset.pattern.permute.xlu0 16
    %90 = vperm.xlu0 %89, %v82
    %v91 = vpop.permute.xlu0 %90
    %vm93 = vcmask 130048
    %v94 = vsel %vm93, %v81, 0
    %v96 = vsel %vm93, %v82, 0
    %98 = vmatpush.msra.mxu0 0.0
    %99 = vmatpush.msra.mxu0 0.0
    %100 = vmatpush.msra.mxu0 0.0
    %101 = vmatpush.msra.mxu0 0.0
    %102 = vmatpush.msra.mxu0 0.0
    %103 = vmatpush.msra.mxu0 0.0
    %104 = vmatpush.msra.mxu0 0.0
    %105 = vmatpush.msra.mxu0 0.0
    %106 = vmatpush.msra.mxu0 0.0
    %107 = vmatpush.msra.mxu0 0.0
    %108 = vmatpush.msra.mxu0 0.0
    %109 = vmatpush.msra.mxu0 0.0
    %110 = vmatpush.msra.mxu0 0.0
    %111 = vmatpush.msra.mxu0 0.0
    %112 = vmatpush.msra.mxu0 %v52
    %113 = vmatpush.msra.mxu0 %v79
    %114 = vmatmul.f32.gmra.mxu0 %v94
    %v115 = vpop.f32.mrf.mxu0
    %v116 = vadd.f32 %v86, %v115
    %117 = vmatmul.f32.gmra.mxu0 %v96
    %v118 = vpop.f32.mrf.mxu0
    %v119 = vadd.f32 %v91, %v118
    %120 = vdwg.mxu0
    %v121 = vmax.f32 %v116, 0.0
    %v122 = vmax.f32 %v119, 0.0
    %v123 = vld [vmem:[%s3] sm:$0xff]
    %v124 = vld [vmem:[%s3 + $0x8] sm:$0xff]
    %v125 = vld [vmem:[%s3 + $0x10] sm:$0xff]
    %v126 = vld [vmem:[%s3 + $0x18] sm:$0xff]
    %v128 = vsel %vm57, %v121, 0
    %v131 = vsel %vm57, %v122, 0
    %133 = vmatpush.msra.mxu0 0.0
    %134 = vmatpush.msra.mxu0 0.0
    %135 = vmatpush.msra.mxu0 0.0
    %136 = vmatpush.msra.mxu0 0.0
    %137 = vmatpush.msra.mxu0 0.0
    %138 = vmatpush.msra.mxu0 0.0
    %139 = vmatpush.msra.mxu0 0.0
    %140 = vmatpush.msra.mxu0 0.0
    %141 = vmatpush.msra.mxu0 0.0
    %142 = vmatpush.msra.mxu0 0.0
    %143 = vmatpush.msra.mxu0 0.0
    %144 = vmatpush.msra.mxu0 0.0
    %145 = vmatpush.msra.mxu0 %v126
    %146 = vmatpush.msra.mxu0 %v125
    %147 = vmatpush.msra.mxu0 %v124
    %148 = vmatpush.msra.mxu0 %v123
    %149 = vmatmul.f32.gmra.mxu0 %v128
    %v150 = vpop.f32.mrf.mxu0
    %v151 = vadd.f32 0.0, %v150
    %152 = vmatmul.f32.gmra.mxu0 %v131
    %v153 = vpop.f32.mrf.mxu0
    %v154 = vadd.f32 0.0, %v153
    %155 = vdwg.mxu0
    %156 = vset.pattern.permute.xlu0 17
    %157 = vperm.xlu0 %156, %v81
    %v158 = vpop.permute.xlu0 %157
    %160 = vset.pattern.permute.xlu0 17
    %161 = vperm.xlu0 %160, %v82
    %v162 = vpop.permute.xlu0 %161
    %v164 = vmul.f32 %v151, %v158
    %v165 = vmul.f32 %v154, %v162
    %vm166 = vcmask 15360
    %v167 = vsel %vm166, %v164, 0.0
    %v168 = vsel %vm166, %v165, 0.0
    %v169 = vadd.f32 %v167, %v168
    %v170 = vrot.slane %v169, 4
    %v171 = vadd.f32 %v169, %v170
    %v172 = vrot.slane %v171, 2
    %v173 = vadd.f32 %v171, %v172
    %v174 = vrot.slane %v173, 1
    %v175 = vadd.f32 %v173, %v174
    %s176 = sld [smem:[#allocation2]]
    %v177 = vstv %s176
    %v178 = vadd.f32 %v175, %v177
    %v179 = vxor.u32 %v178, 2147483648
    %v180 = vmul.f32 %v179, 1.442695
    %v181 = vpow.pop %v180
    %v182 = vadd.f32 %v181, 1.0
    %v183 = vrcp.pop %v182
    %v184 = vmul.f32 %v182, %v183
    %v185 = vsub.f32 1.0, %v184
    %v186 = vmul.f32 %v183, %v185
    %v187 = vadd.f32 %v183, %v186
    %vm188 = vweird.f32 %v182
    %vm189 = vweird.f32 %v183
    %vm190 = vmor %vm188, %vm189
    %v191 = vsel %vm190, %v183, %v187
    %v192 = vand.u32 2147483647, %v182
    %vm193 = vcmp.eq.f32.partialorder %v192, 8.507059e+37
    %v194 = vand.u32 %v182, 2147483648
    %v195 = vor.u32 1.1754944e-38, %v194
    %v196 = vsel %vm193, %v195, %v191
    %v197 = vmul.f32 1.0, %v196
    %vm198 = vcmask 8192
    %199 = vst.msk [vmem:[#allocation8] sm:$0x1] %vm198, %v197
    // Predicated region
    $region30: #{tpu_custom_call.1} parent=1 // pred_check
      _
    $region31: #{tpu_custom_call.1} parent=1 // pred_check_branch
      %201 = sbr.rel (0) target = $region33
    $region32: #{tpu_custom_call.1} parent=1 // pred_region
      %203 = vsyncadd [#allocation5], 0
      %s205 = sshll.u32 [#allocation8], 4
      %s206 = int_to_ptr.vmem [resolvable:$true] %s205
      %s207 = sshll.u32 %s5, 4
      %s208 = int_to_ptr.hbm [resolvable:$true] %s207
      %210 = dma.vmem_to_hbm [thread:$0]  %s206, 16, %s208, [#allocation5]
    $region33: #{tpu_custom_call.1} parent=1 // pred_fallthru
      _
    // Predicated region
    $region34: #{tpu_custom_call.1} parent=1 // pred_check
      _
    $region35: #{tpu_custom_call.1} parent=1 // pred_check_branch
      %212 = sbr.rel (0) target = $region37
    $region36: #{tpu_custom_call.1} parent=1 // pred_region
      %214 = dma.done [#allocation5], 16
    $region37: #{tpu_custom_call.1} parent=1 // pred_fallthru
      _
    %215 = vsyncpa [#allocation4], 1
    %216 = vsyncpa [#allocation7], 1
    %217 = vsyncpa [#allocation5], 1

</llo_original>
